<compile_context>
chip_gen: v7x
topology: tpu7x:2x2x1
jax: 0.10.0
libtpu: 0.0.40
codegen_flags: <defaults>
</compile_context>

<pallas_src>
import functools

import jax
import jax.numpy as jnp
from jax.experimental import pallas as pl
from jax.experimental.pallas import tpu as pltpu


def _round_up(n, m):
    return ((n + m - 1) // m) * m


def se_kernel(x_ref, w1t_ref, w2t_ref, o_ref, *, inv_hw, channels_last):
    # channels_last=False: x_ref / o_ref are (B_blk, C, HW)   (lane axis = HW)
    # channels_last=True : x_ref / o_ref are (B_blk, HW, C)   (lane axis = C)
    # w1t_ref: (C, C_red) f32 ; w2t_ref: (C_red, C) f32

    # Squeeze: global average pool with f32 accumulation (no full-tile f32
    # copy); 1/(H*W) folded into one scalar multiply.
    if channels_last:
        pooled = jnp.sum(x_ref[...], axis=1, dtype=jnp.float32) * inv_hw   # (B_blk, C)
    else:
        pooled = jnp.sum(x_ref[...], axis=2, dtype=jnp.float32) * inv_hw   # (B_blk, C)

    # Excitation: Linear -> ReLU -> Linear -> Sigmoid (tiny, stays in f32).
    h = jnp.dot(pooled, w1t_ref[...], preferred_element_type=jnp.float32)  # (B_blk, C_red)
    h = jnp.maximum(h, 0.0)
    y = jnp.dot(h, w2t_ref[...], preferred_element_type=jnp.float32)       # (B_blk, C)
    y = jax.nn.sigmoid(y)

    # Scale: re-read x_ref (cheap VMEM loads) so the big tile is not kept live
    # across the excitation chain. Rescale runs in x's native dtype to avoid a
    # full-tile f32 copy (tiny precision delta vs. f32-then-downcast for bf16).
    scale = y.astype(x_ref.dtype)
    if channels_last:
        o_ref[...] = (x_ref[...] * scale[:, None, :]).astype(o_ref.dtype)
    else:
        o_ref[...] = (x_ref[...] * scale[:, :, None]).astype(o_ref.dtype)


def se_layer(x, w1, w2, *, batch_block=None, channels_last=None):
    """SE forward. x: (B, C, H, W); w1: (C//r, C); w2: (C, C//r) -> (B, C, H, W)."""
    B, C, H, W = x.shape
    c_red = w1.shape[0]
    HW = H * W

    # ---- layout selection -------------------------------------------------
    # Prefer a lane (last) axis >= 128. The channel-last path needs wrapper
    # transposes (extra HBM passes), so only switch when the spatial axis is
    # narrow AND channels give a full-width lane axis.
    if channels_last is None:
        channels_last = (HW < 128) and (C >= 128)

    if channels_last:
        x2 = jnp.transpose(x.reshape(B, C, HW), (0, 2, 1))   # (B, HW, C)
        rows, lanes = HW, C
    else:
        x2 = x.reshape(B, C, HW)                              # (B, C, HW)
        rows, lanes = C, HW

    # Pre-transposed, pre-cast weights (trace-time; constant index_map keeps
    # them VMEM-resident across grid steps, no per-step casts in the kernel).
    w1t = jnp.transpose(w1).astype(jnp.float32)               # (C, C_red)
    w2t = jnp.transpose(w2).astype(jnp.float32)               # (C_red, C)

    # ---- generation-aware VMEM sizing --------------------------------------
    try:
        info = pltpu.get_tpu_info()
        vmem_cap = int(getattr(info, "vmem_capacity_bytes", 0)) or (128 << 20)
    except Exception:
        vmem_cap = 128 << 20
    # v7x (64 MiB physical): 48 MiB scoped limit; v5e/v6e (128 MiB): 64 MiB.
    vmem_limit = min((vmem_cap * 3) // 4, 64 << 20)
    # Double-buffered in+out tile footprint target (~half the scoped limit,
    # leaving headroom for weights, intermediates and compiler scratch).
    tile_budget = vmem_limit // 2

    itemsize = x.dtype.itemsize
    sublane = 8 * max(1, 4 // itemsize)                       # 8 f32 / 16 bf16 / 32 i8
    padded_image_bytes = _round_up(rows, sublane) * _round_up(lanes, 128) * itemsize
    # (input tile + output tile), each double-buffered by the Pallas pipeline.
    per_image_footprint = 4 * padded_image_bytes

    if batch_block is None:
        batch_block = max(1, tile_budget // per_image_footprint)
        if B >= 2:
            # Keep >= 2 grid steps so the "parallel" axis can shard across
            # v7x's two TensorCores (negligible cost on 1-TC v5e/v6e).
            batch_block = min(batch_block, pl.cdiv(B, 2))
    batch_block = max(1, min(batch_block, B))
    # TODO(synk): if a single image exceeds tile_budget, add an HW-split grid
    # axis (two-pass: accumulate partial pooled sums, then rescale) instead of
    # one oversized tile.

    grid = (pl.cdiv(B, batch_block),)   # ragged last block handled by Pallas

    kernel = functools.partial(se_kernel, inv_hw=1.0 / HW, channels_last=channels_last)
    out = pl.pallas_call(
        kernel,
        out_shape=jax.ShapeDtypeStruct(x2.shape, x.dtype),
        grid_spec=pltpu.PrefetchScalarGridSpec(
            num_scalar_prefetch=0,
            grid=grid,
            in_specs=[
                pl.BlockSpec((batch_block, rows, lanes), lambda b: (b, 0, 0)),
                pl.BlockSpec((C, c_red), lambda b: (0, 0)),
                pl.BlockSpec((c_red, C), lambda b: (0, 0)),
            ],
            out_specs=pl.BlockSpec((batch_block, rows, lanes), lambda b: (b, 0, 0)),
        ),
        compiler_params=pltpu.CompilerParams(
            dimension_semantics=("parallel",),
            vmem_limit_bytes=vmem_limit),
    )(x2, w1t, w2t)

    if channels_last:
        return jnp.transpose(out, (0, 2, 1)).reshape(B, C, H, W)
    return out.reshape(B, C, H, W)


def reference(x, w1, w2):
    pooled = jnp.mean(x, axis=(2, 3))                          # (B, C)
    h = jnp.maximum(pooled @ w1.T, 0.0)                        # (B, C//r)
    y = jax.nn.sigmoid(h @ w2.T)                               # (B, C)
    return x * y[:, :, None, None]


if __name__ == "__main__":
    key = jax.random.PRNGKey(0)

    def make_inputs(k, B, C, H, W, reduction):
        c_red = C // reduction
        kx, k1, k2 = jax.random.split(k, 3)
        x = jax.random.normal(kx, (B, C, H, W), dtype=jnp.float32)
        # kaiming_normal_(a=0, mode='fan_out'): std = sqrt(2 / out_features).
        w1 = jax.random.normal(k1, (c_red, C), dtype=jnp.float32) * jnp.sqrt(2.0 / c_red)
        w2 = jax.random.normal(k2, (C, c_red), dtype=jnp.float32) * jnp.sqrt(2.0 / C)
        return x, w1, w2

    configs = [
        (2, 64, 8, 8, 16),    # channels-first path (lane = HW = 64)
        (2, 128, 4, 4, 16),   # channels-last path  (lane = C = 128)
        (3, 64, 8, 8, 16),    # non-divisor batch -> partial last block
    ]
    for i, (B, C, H, W, r) in enumerate(configs):
        key, sub = jax.random.split(key)
        x, w1, w2 = make_inputs(sub, B, C, H, W, r)
        out = jax.block_until_ready(se_layer(x, w1, w2))
        ref = reference(x, w1, w2)
        assert out.shape == x.shape, f"shape mismatch on config {i}"
        assert jnp.allclose(out, ref, atol=1e-5, rtol=1e-5), f"value mismatch on config {i}"

    print("KERNEL_OK")
</pallas_src>

<mosaic_0001>
module attributes {stable_mosaic.version = 11 : i64} {
  func.func @se_kernel(%arg0: i32, %arg1: memref<1x64x64xf32, #tpu.memory_space<vmem>>, %arg2: memref<64x4xf32, #tpu.memory_space<vmem>>, %arg3: memref<4x64xf32, #tpu.memory_space<vmem>>, %arg4: memref<1x64x64xf32, #tpu.memory_space<vmem>>) attributes {dimension_semantics = [#tpu.dimension_semantics<parallel>], iteration_bounds = array<i64: 2>, scalar_prefetch = 0 : i64, scratch_operands = 0 : i64, tpu.core_type = #tpu.core_type<tc>, window_params = [{transform_indices = @transform_0, window_bounds = array<i64: 1, 64, 64>}, {pipeline_mode = #tpu.pipeline_mode<synchronous>, transform_indices = @transform_1, window_bounds = array<i64: 64, 4>}, {pipeline_mode = #tpu.pipeline_mode<synchronous>, transform_indices = @transform_2, window_bounds = array<i64: 4, 64>}, {transform_indices = @transform_3, window_bounds = array<i64: 1, 64, 64>}]} {
    %c0 = arith.constant 0 : index
    %c0_0 = arith.constant 0 : index
    %c0_1 = arith.constant 0 : index
    %0 = vector.load %arg1[%c0, %c0_0, %c0_1] : memref<1x64x64xf32, #tpu.memory_space<vmem>>, vector<1x64x64xf32>
    %cst = arith.constant dense<0.000000e+00> : vector<1x64xf32>
    %1 = vector.multi_reduction <add>, %0, %cst [2] : vector<1x64x64xf32> to vector<1x64xf32>
    %cst_2 = arith.constant 1.562500e-02 : f32
    %2 = vector.broadcast %cst_2 : f32 to vector<1x64xf32>
    %3 = arith.mulf %1, %2 : vector<1x64xf32>
    %c0_3 = arith.constant 0 : index
    %c0_4 = arith.constant 0 : index
    %4 = vector.load %arg2[%c0_3, %c0_4] : memref<64x4xf32, #tpu.memory_space<vmem>>, vector<64x4xf32>
    %cst_5 = arith.constant dense<0.000000e+00> : vector<1x4xf32>
    %5 = tpu.matmul %3, %4, %cst_5 {dimension_numbers = #tpu.dot_dimension_numbers<[1], [0], [0], [1], [0, 0, 1, 1], [], []>} : vector<1x64xf32>, vector<64x4xf32>, vector<1x4xf32> -> vector<1x4xf32>
    %cst_6 = arith.constant 0.000000e+00 : f32
    %6 = vector.broadcast %cst_6 : f32 to vector<1x4xf32>
    %7 = arith.maximumf %5, %6 : vector<1x4xf32>
    %c0_7 = arith.constant 0 : index
    %c0_8 = arith.constant 0 : index
    %8 = vector.load %arg3[%c0_7, %c0_8] : memref<4x64xf32, #tpu.memory_space<vmem>>, vector<4x64xf32>
    %cst_9 = arith.constant dense<0.000000e+00> : vector<1x64xf32>
    %9 = tpu.matmul %7, %8, %cst_9 {dimension_numbers = #tpu.dot_dimension_numbers<[1], [0], [0], [1], [0, 0, 1, 1], [], []>} : vector<1x4xf32>, vector<4x64xf32>, vector<1x64xf32> -> vector<1x64xf32>
    %10 = arith.negf %9 : vector<1x64xf32>
    %11 = math.exp %10 : vector<1x64xf32>
    %cst_10 = arith.constant 1.000000e+00 : f32
    %12 = vector.broadcast %cst_10 : f32 to vector<1x64xf32>
    %13 = arith.addf %12, %11 : vector<1x64xf32>
    %14 = arith.divf %12, %13 : vector<1x64xf32>
    %c0_11 = arith.constant 0 : index
    %c0_12 = arith.constant 0 : index
    %c0_13 = arith.constant 0 : index
    %15 = vector.load %arg1[%c0_11, %c0_12, %c0_13] : memref<1x64x64xf32, #tpu.memory_space<vmem>>, vector<1x64x64xf32>
    %16 = vector.shape_cast %14 : vector<1x64xf32> to vector<1x64x1xf32>
    %17 = vector.broadcast %16 : vector<1x64x1xf32> to vector<1x64x64xf32>
    %18 = arith.mulf %15, %17 : vector<1x64x64xf32>
    %c0_14 = arith.constant 0 : index
    %c0_15 = arith.constant 0 : index
    %c0_16 = arith.constant 0 : index
    %19 = vector.load %arg4[%c0_14, %c0_15, %c0_16] : memref<1x64x64xf32, #tpu.memory_space<vmem>>, vector<1x64x64xf32>
    tpu.vector_store %arg4[%c0_14, %c0_15, %c0_16], %18 {strides = array<i32>} : memref<1x64x64xf32, #tpu.memory_space<vmem>>, vector<1x64x64xf32>,
    return
  }
  func.func @transform_0(%arg0: i32) -> (i32, i32, i32) {
    %c0_i32 = arith.constant 0 : i32
    %c0_i32_0 = arith.constant 0 : i32
    %c0_i32_1 = arith.constant 0 : i32
    return %arg0, %c0_i32, %c0_i32_0 : i32, i32, i32
  }
  func.func @transform_1(%arg0: i32) -> (i32, i32) {
    %c0_i32 = arith.constant 0 : i32
    %c0_i32_0 = arith.constant 0 : i32
    %c0_i32_1 = arith.constant 0 : i32
    return %c0_i32, %c0_i32_0 : i32, i32
  }
  func.func @transform_2(%arg0: i32) -> (i32, i32) {
    %c0_i32 = arith.constant 0 : i32
    %c0_i32_0 = arith.constant 0 : i32
    %c0_i32_1 = arith.constant 0 : i32
    return %c0_i32, %c0_i32_0 : i32, i32
  }
  func.func @transform_3(%arg0: i32) -> (i32, i32, i32) {
    %c0_i32 = arith.constant 0 : i32
    %c0_i32_0 = arith.constant 0 : i32
    %c0_i32_1 = arith.constant 0 : i32
    return %arg0, %c0_i32, %c0_i32_0 : i32, i32, i32
  }
}

</mosaic_0001>

<llo_original>
// kernel: tpu_custom_call.1
$region0: #{tpu_custom_call.1}
  #allocation0 [shape = 'u32[]', space=smem, size = 0x4, offset = 0x4, fixed_abs, tag = 'smem constant byte address 0x4 - core index']
  #allocation1 [shape = 'u32[144,128]{1,0:T(1,128)}', space=vmem, size = 0x12000, scoped, tag = 'internal scratch']
  %s0 = inlined_call_operand.hbm [shape: f32[2,64,64], index: 0, kind: input, shape index: {}]
  %s1 = inlined_call_operand.hbm [shape: f32[64,4], index: 1, kind: input, shape index: {}]
  %s2 = inlined_call_operand.hbm [shape: f32[4,64], index: 2, kind: input, shape index: {}]
  %s3 = inlined_call_operand.hbm [shape: f32[2,64,64], index: 3, kind: output, shape index: {}]
  %s4 = sld [smem:[#allocation0]]
  $region57: #{tpu_custom_call.1} parent=0
    _
  %s6 = ssub.s32 1, %s4
  %s7 = scalar_select 0, %s6, %s4
  $region1: #{tpu_custom_call.1} parent=0
    #allocation2 [shape = 'u8[65536]{0}', space=vmem, size = 0x10000, scoped, tag = 'input window, operand 0']
    #allocation3 [shape = 's32[2]{0}', space=sflag, size = 0x8, scoped, tag = 'scoped memory for tpu_custom_call.1']
    #allocation4 [shape = 's32[2]{0}', space=sflag, size = 0x8, scoped, tag = 'scoped memory for tpu_custom_call.1']
    #allocation5 [shape = 'u8[32768]{0}', space=vmem, size = 0x8000, scoped, tag = 'input window, operand 1, single buffered']
    #allocation6 [shape = 's32[1]{0}', space=sflag, size = 0x4, scoped, tag = 'scoped memory for tpu_custom_call.1']
    #allocation7 [shape = 'u8[2048]{0}', space=vmem, size = 0x800, scoped, tag = 'input window, operand 2, single buffered']
    #allocation8 [shape = 'u8[65536]{0}', space=vmem, size = 0x10000, scoped, tag = 'output window, operand 0']
    %8 = vsyncpa [#allocation3], 0
    %s9 = scalar_lea.sflag [#allocation3], 1
    %10 = vsyncpa %s9, 0
    %11 = vsyncpa [#allocation6], 0
    %12 = vsyncpa [#allocation4], 0
    %s13 = scalar_lea.sflag [#allocation4], 1
    %14 = vsyncpa %s13, 0
    loop: start=0, step=1, limit=4
    $region2: #{tpu_custom_call.1} parent=1 // loop_pre_header
      _
    $region3: #{tpu_custom_call.1} parent=1 // loop_header
      %s16 = sphi 0, %s20
      %p17 = scmp.ge.s32.totalorder %s16, 4
      %s26 = sphi 0, %s28
      %s29 = sphi 0, %s26
      %s30 = sphi 0, %s29
      %s46 = sphi 0, %s30
      %s50 = sphi 0, %s50
      %s52 = sphi 0, %s50
      %s53 = sphi 0, %s52
      %s67 = sphi 0, %s53
      %s71 = sphi 0, %s71
      %s73 = sphi 0, %s71
      %s74 = sphi 0, %s73
      %s88 = sphi 0, %s74
      %s94 = sphi 0, %s96
      %s97 = sphi 0, %s94
      %s98 = sphi 0, %s97
      %s114 = sphi 0, %s98
    $region4: #{tpu_custom_call.1} parent=1 // loop_header_branch
      %19 = sbr.rel (%p17) target = $region8
    $region5: #{tpu_custom_call.1} parent=1 // loop_body
      %s21 = ssub.s32 %s16, 1
      %s22 = ssub.s32 %s16, 2
      %s23 = sadd.s32 %s16, 1
      %s24 = ssub.s32 %s16, %s23
      %p25 = scmp.eq.s32.totalorder %s24, 0
      %s27 = sadd.s32 %s26, 1
      %s28 = scalar_select %p25, %s26, %s27
      %p31 = pneg %p25
      %p32 = scmp.eq.s32.totalorder %s16, 1
      %p33 = por %p31, %p32
      %p34 = scmp.ne.s32.totalorder %s26, %s29
      %p35 = scmp.eq.s32.totalorder %s16, 0
      %p36 = por %p34, %p35
      %p37 = scmp.ne.s32.totalorder %s26, %s29
      %p38 = scmp.eq.s32.totalorder %s21, 1
      %p39 = por %p37, %p38
      %p40 = scmp.ne.s32.totalorder %s29, %s30
      %p41 = scmp.eq.s32.totalorder %s21, 0
      %p42 = por %p40, %p41
      %p43 = scmp.ne.s32.totalorder %s29, %s30
      %p44 = scmp.eq.s32.totalorder %s22, 1
      %p45 = por %p43, %p44
      %p47 = scmp.ne.s32.totalorder %s30, %s46
      %p48 = scmp.eq.s32.totalorder %s22, 0
      %p49 = por %p47, %p48
      %s51 = sadd.s32 %s50, 1
      %p54 = scmp.eq.s32.totalorder %s16, 1
      %p55 = scmp.ne.s32.totalorder %s50, %s52
      %p56 = scmp.eq.s32.totalorder %s16, 0
      %p57 = por %p55, %p56
      %p58 = scmp.ne.s32.totalorder %s50, %s52
      %p59 = scmp.eq.s32.totalorder %s21, 1
      %p60 = por %p58, %p59
      %p61 = scmp.ne.s32.totalorder %s52, %s53
      %p62 = scmp.eq.s32.totalorder %s21, 0
      %p63 = por %p61, %p62
      %p64 = scmp.ne.s32.totalorder %s52, %s53
      %p65 = scmp.eq.s32.totalorder %s22, 1
      %p66 = por %p64, %p65
      %p68 = scmp.ne.s32.totalorder %s53, %s67
      %p69 = scmp.eq.s32.totalorder %s22, 0
      %p70 = por %p68, %p69
      %s72 = sadd.s32 %s71, 1
      %p75 = scmp.eq.s32.totalorder %s16, 1
      %p76 = scmp.ne.s32.totalorder %s71, %s73
      %p77 = scmp.eq.s32.totalorder %s16, 0
      %p78 = por %p76, %p77
      %p79 = scmp.ne.s32.totalorder %s71, %s73
      %p80 = scmp.eq.s32.totalorder %s21, 1
      %p81 = por %p79, %p80
      %p82 = scmp.ne.s32.totalorder %s73, %s74
      %p83 = scmp.eq.s32.totalorder %s21, 0
      %p84 = por %p82, %p83
      %p85 = scmp.ne.s32.totalorder %s73, %s74
      %p86 = scmp.eq.s32.totalorder %s22, 1
      %p87 = por %p85, %p86
      %p89 = scmp.ne.s32.totalorder %s74, %s88
      %p90 = scmp.eq.s32.totalorder %s22, 0
      %p91 = por %p89, %p90
      %s92 = ssub.s32 %s16, %s23
      %p93 = scmp.eq.s32.totalorder %s92, 0
      %s95 = sadd.s32 %s94, 1
      %s96 = scalar_select %p93, %s94, %s95
      %p99 = pneg %p93
      %p100 = scmp.eq.s32.totalorder %s16, 1
      %p101 = por %p99, %p100
      %p102 = scmp.ne.s32.totalorder %s94, %s97
      %p103 = scmp.eq.s32.totalorder %s16, 0
      %p104 = por %p102, %p103
      %p105 = scmp.ne.s32.totalorder %s94, %s97
      %p106 = scmp.eq.s32.totalorder %s21, 1
      %p107 = por %p105, %p106
      %p108 = scmp.ne.s32.totalorder %s97, %s98
      %p109 = scmp.eq.s32.totalorder %s21, 0
      %p110 = por %p108, %p109
      %p111 = scmp.ne.s32.totalorder %s97, %s98
      %p112 = scmp.eq.s32.totalorder %s22, 1
      %p113 = por %p111, %p112
      %p115 = scmp.ne.s32.totalorder %s98, %s114
      %p116 = scmp.eq.s32.totalorder %s22, 0
      %p117 = por %p115, %p116
      %p118 = scmp.le.s32.totalorder 1, %s16
      %p119 = scmp.lt.s32.totalorder %s16, 3
      %p120 = pnand %p118, %p119
      %p121 = pneg %p120
      // Predicated region
      $region9: #{tpu_custom_call.1} parent=5 // pred_check
        _
      $region10: #{tpu_custom_call.1} parent=5 // pred_check_branch
        %123 = sbr.rel (%p120) target = $region12
      $region11: #{tpu_custom_call.1} parent=5 // pred_region
        %s124 = ssub.s32 %s16, 1
        // Predicated region
        $region13: #{tpu_custom_call.1} parent=11 // pred_check
          %p125 = pneg %p63
        $region14: #{tpu_custom_call.1} parent=11 // pred_check_branch
          %127 = sbr.rel (%p125) target = $region16
        $region15: #{tpu_custom_call.1} parent=11 // pred_region
          %s129 = ssub.s32 1024, 1024
          %130 = vsyncadd [#allocation6], %s129
          %s131 = sshll.u32 [#allocation5], 4
          %s132 = int_to_ptr.vmem [resolvable:$true] %s131
          %137 = dma.hbm_to_vmem [thread:$0]  %s1, 1024, %s132, [#allocation6], 128, 128, 8
        $region16: #{tpu_custom_call.1} parent=11 // pred_fallthru
          _
        // Predicated region
        $region17: #{tpu_custom_call.1} parent=11 // pred_check
          %p138 = pneg %p84
        $region18: #{tpu_custom_call.1} parent=11 // pred_check_branch
          %140 = sbr.rel (%p138) target = $region20
        $region19: #{tpu_custom_call.1} parent=11 // pred_region
          %s142 = ssub.s32 64, 64
          %143 = vsyncadd [#allocation6], %s142
          %s145 = sshll.u32 [#allocation7], 4
          %s146 = int_to_ptr.vmem [resolvable:$true] %s145
          %148 = dma.hbm_to_vmem [thread:$0]  %s2, 64, %s146, [#allocation6]
        $region20: #{tpu_custom_call.1} parent=11 // pred_fallthru
          _
      $region12: #{tpu_custom_call.1} parent=5 // pred_fallthru
        _
      %p149 = scmp.lt.s32.totalorder %s16, 2
      // Predicated region
      $region21: #{tpu_custom_call.1} parent=5 // pred_check
        %p150 = pneg %p149
      $region22: #{tpu_custom_call.1} parent=5 // pred_check_branch
        %152 = sbr.rel (%p150) target = $region24
      $region23: #{tpu_custom_call.1} parent=5 // pred_region
        // Predicated region
        $region25: #{tpu_custom_call.1} parent=23 // pred_check
          %p153 = pneg %p36
        $region26: #{tpu_custom_call.1} parent=23 // pred_check_branch
          %155 = sbr.rel (%p153) target = $region28
        $region27: #{tpu_custom_call.1} parent=23 // pred_region
          %s156 = sand.u32 %s26, 1
          %s157 = scalar_lea.sflag [#allocation3], %s156
          %s158 = sand.u32 %s26, 1
          %s159 = smul.addr %s158, 64
          %s160 = scalar_lea.vmem [#allocation2], %s159
          %s162 = ssub.s32 1024, 1024
          %163 = vsyncadd %s157, %s162
          %s164 = smul.addr %s16, 8
          %s165 = smul.addr %s164, 128
          %s166 = scalar_lea.hbm %s0, %s165
          %s167 = sshll.u32 %s160, 4
          %s168 = int_to_ptr.vmem [resolvable:$true] %s167
          %173 = dma.hbm_to_vmem [thread:$0]  %s166, 1024, %s168, %s157, 128, 128, 8
        $region28: #{tpu_custom_call.1} parent=23 // pred_fallthru
          _
      $region24: #{tpu_custom_call.1} parent=5 // pred_fallthru
        _
      %p174 = scmp.le.s32.totalorder 1, %s16
      %p175 = scmp.lt.s32.totalorder %s16, 3
      %p176 = pnand %p174, %p175
      %p177 = pneg %p176
      // Predicated region
      $region29: #{tpu_custom_call.1} parent=5 // pred_check
        _
      $region30: #{tpu_custom_call.1} parent=5 // pred_check_branch
        %179 = sbr.rel (%p176) target = $region32
      $region31: #{tpu_custom_call.1} parent=5 // pred_region
        %s180 = ssub.s32 %s16, 1
        %s181 = sand.u32 %s29, 1
        %s182 = scalar_lea.sflag [#allocation3], %s181
        %s183 = sand.u32 %s29, 1
        %s184 = smul.addr %s183, 64
        %s185 = scalar_lea.vmem [#allocation2], %s184
        // Predicated region
        $region33: #{tpu_custom_call.1} parent=31 // pred_check
          %p186 = pneg %p42
        $region34: #{tpu_custom_call.1} parent=31 // pred_check_branch
          %188 = sbr.rel (%p186) target = $region36
        $region35: #{tpu_custom_call.1} parent=31 // pred_region
          %189 = dma.done %s182, 1024
        $region36: #{tpu_custom_call.1} parent=31 // pred_fallthru
          _
        // Predicated region
        $region37: #{tpu_custom_call.1} parent=31 // pred_check
          %p190 = pneg %p63
        $region38: #{tpu_custom_call.1} parent=31 // pred_check_branch
          %192 = sbr.rel (%p190) target = $region40
        $region39: #{tpu_custom_call.1} parent=31 // pred_region
          %193 = dma.done [#allocation6], 1024
        $region40: #{tpu_custom_call.1} parent=31 // pred_fallthru
          _
        // Predicated region
        $region41: #{tpu_custom_call.1} parent=31 // pred_check
          %p194 = pneg %p84
        $region42: #{tpu_custom_call.1} parent=31 // pred_check_branch
          %196 = sbr.rel (%p194) target = $region44
        $region43: #{tpu_custom_call.1} parent=31 // pred_region
          %197 = dma.done [#allocation6], 64
        $region44: #{tpu_custom_call.1} parent=31 // pred_fallthru
          _
        %s198 = sand.u32 %s29, 1
        %s199 = scalar_lea.sflag [#allocation3], %s198
        %s200 = sand.u32 %s29, 1
        %s201 = smul.addr %s200, 64
        %s202 = scalar_lea.vmem [#allocation2], %s201
        %p203 = pneg %p42
        %p204 = pneg %p39
        %p205 = pneg %p63
        %p206 = pneg %p60
        %p207 = pneg %p84
        %p208 = pneg %p81
        %p209 = pneg %p110
        %p210 = pneg %p107
        %s211 = sand.u32 %s97, 1
        %s212 = scalar_lea.sflag [#allocation4], %s211
        %s213 = sand.u32 %s97, 1
        %s214 = smul.addr %s213, 64
        %s215 = scalar_lea.vmem [#allocation8], %s214
        %v216 = vld [vmem:[%s185] sm:$0xff]
        %v217 = vld [vmem:[%s185 + $0x8] sm:$0xff]
        %v218 = vld [vmem:[%s185 + $0x10] sm:$0xff]
        %v219 = vld [vmem:[%s185 + $0x18] sm:$0xff]
        %v220 = vld [vmem:[%s185 + $0x20] sm:$0xff]
        %v221 = vld [vmem:[%s185 + $0x28] sm:$0xff]
        %v222 = vld [vmem:[%s185 + $0x30] sm:$0xff]
        %v223 = vld [vmem:[%s185 + $0x38] sm:$0xff]
        %vm224 = vcmask 523264
        %v225 = vsel %vm224, %v216, 0.0
        %226 = vadd.xlane.f32.xlu0 %v225
        %v227 = vpop.xlane.xlu0 %226
        %v228 = vsel %vm224, %v217, 0.0
        %229 = vadd.xlane.f32.xlu0 %v228
        %v230 = vpop.xlane.xlu0 %229
        %v231 = vsel %vm224, %v218, 0.0
        %232 = vadd.xlane.f32.xlu0 %v231
        %v233 = vpop.xlane.xlu0 %232
        %v234 = vsel %vm224, %v219, 0.0
        %235 = vadd.xlane.f32.xlu0 %v234
        %v236 = vpop.xlane.xlu0 %235
        %v237 = vsel %vm224, %v220, 0.0
        %238 = vadd.xlane.f32.xlu0 %v237
        %v239 = vpop.xlane.xlu0 %238
        %v240 = vsel %vm224, %v221, 0.0
        %241 = vadd.xlane.f32.xlu0 %v240
        %v242 = vpop.xlane.xlu0 %241
        %v243 = vsel %vm224, %v222, 0.0
        %244 = vadd.xlane.f32.xlu0 %v243
        %v245 = vpop.xlane.xlu0 %244
        %v246 = vsel %vm224, %v223, 0.0
        %247 = vadd.xlane.f32.xlu0 %v246
        %v248 = vpop.xlane.xlu0 %247
        %v249 = vmul.f32 %v227, 0.015625
        %v250 = vmul.f32 %v230, 0.015625
        %v251 = vmul.f32 %v233, 0.015625
        %v252 = vmul.f32 %v236, 0.015625
        %v253 = vmul.f32 %v239, 0.015625
        %v254 = vmul.f32 %v242, 0.015625
        %v255 = vmul.f32 %v245, 0.015625
        %v256 = vmul.f32 %v248, 0.015625
        %v257 = vld [vmem:[#allocation5] sm:$0xff]
        %v258 = vld [vmem:[#allocation5 + $0x8] sm:$0xff]
        %v259 = vld [vmem:[#allocation5 + $0x10] sm:$0xff]
        %v260 = vld [vmem:[#allocation5 + $0x18] sm:$0xff]
        %v261 = vld [vmem:[#allocation5 + $0x20] sm:$0xff]
        %v262 = vld [vmem:[#allocation5 + $0x28] sm:$0xff]
        %v263 = vld [vmem:[#allocation5 + $0x30] sm:$0xff]
        %v264 = vld [vmem:[#allocation5 + $0x38] sm:$0xff]
        %v273 = vlaneseq
        %v274 = vand.u32 %v273, 127
        %v275 = vlaneseq
        %v276 = vshrl.u32 %v275, 7
        %v277 = vsub.s32 %v274, %v276
        %v278 = vrot.slane %v249, %v277
        %v279 = vadd.s32 %v274, 4294967288
        %v280 = vlaneseq
        %v281 = vshrl.u32 %v280, 7
        %v282 = vsub.s32 %v279, %v281
        %v283 = vrot.slane %v250, %v282
        %vm284 = vcmask 130112
        %v285 = vsel %vm284, %v283, %v278
        %v286 = vadd.s32 %v274, 4294967280
        %v287 = vlaneseq
        %v288 = vshrl.u32 %v287, 7
        %v289 = vsub.s32 %v286, %v288
        %v290 = vrot.slane %v251, %v289
        %vm291 = vcmask 195712
        %v292 = vsel %vm291, %v290, %v285
        %v293 = vadd.s32 %v274, 4294967272
        %v294 = vlaneseq
        %v295 = vshrl.u32 %v294, 7
        %v296 = vsub.s32 %v293, %v295
        %v297 = vrot.slane %v252, %v296
        %vm298 = vcmask 261312
        %v299 = vsel %vm298, %v297, %v292
        %v300 = vadd.s32 %v274, 4294967264
        %v301 = vlaneseq
        %v302 = vshrl.u32 %v301, 7
        %v303 = vsub.s32 %v300, %v302
        %v304 = vrot.slane %v253, %v303
        %vm305 = vcmask 326912
        %v306 = vsel %vm305, %v304, %v299
        %v307 = vadd.s32 %v274, 4294967256
        %v308 = vlaneseq
        %v309 = vshrl.u32 %v308, 7
        %v310 = vsub.s32 %v307, %v309
        %v311 = vrot.slane %v254, %v310
        %vm312 = vcmask 392512
        %v313 = vsel %vm312, %v311, %v306
        %v314 = vadd.s32 %v274, 4294967248
        %v315 = vlaneseq
        %v316 = vshrl.u32 %v315, 7
        %v317 = vsub.s32 %v314, %v316
        %v318 = vrot.slane %v255, %v317
        %vm319 = vcmask 458112
        %v320 = vsel %vm319, %v318, %v313
        %v321 = vadd.s32 %v274, 4294967240
        %v322 = vlaneseq
        %v323 = vshrl.u32 %v322, 7
        %v324 = vsub.s32 %v321, %v323
        %v325 = vrot.slane %v256, %v324
        %vm326 = vcmask 523712
        %v327 = vsel %vm326, %v325, %v320
        %v328 = vsel %vm224, %v327, 0
        %330 = vmatprep.subr.mxu0 0.0
        %331 = vmatpush1.msra.mxu0 %v257
        %332 = vmatprep.subr.mxu0 0.0
        %333 = vmatpush1.msra.mxu0 %v258
        %334 = vmatprep.subr.mxu0 0.0
        %335 = vmatpush1.msra.mxu0 %v259
        %336 = vmatprep.subr.mxu0 0.0
        %337 = vmatpush1.msra.mxu0 %v260
        %338 = vmatprep.subr.mxu0 0.0
        %339 = vmatpush1.msra.mxu0 %v261
        %340 = vmatprep.subr.mxu0 0.0
        %341 = vmatpush1.msra.mxu0 %v262
        %342 = vmatprep.subr.mxu0 0.0
        %343 = vmatpush1.msra.mxu0 %v263
        %344 = vmatprep.subr.mxu0 0.0
        %345 = vmatpush1.msra.mxu0 %v264
        %346 = vmatprep.subr.mxu0 0.0
        %347 = vmatpush1.msra.mxu0 0.0
        %348 = vmatprep.subr.mxu0 0.0
        %349 = vmatpush1.msra.mxu0 0.0
        %350 = vmatprep.subr.mxu0 0.0
        %351 = vmatpush1.msra.mxu0 0.0
        %352 = vmatprep.subr.mxu0 0.0
        %353 = vmatpush1.msra.mxu0 0.0
        %354 = vmatprep.subr.mxu0 0.0
        %355 = vmatpush1.msra.mxu0 0.0
        %356 = vmatprep.subr.mxu0 0.0
        %357 = vmatpush1.msra.mxu0 0.0
        %358 = vmatprep.subr.mxu0 0.0
        %359 = vmatpush1.msra.mxu0 0.0
        %360 = vmatprep.subr.mxu0 0.0
        %361 = vmatpush1.msra.mxu0 0.0
        %362 = vmatprep.subr.mxu0 0.0
        %363 = vmatpush1.msra.mxu0 0.0
        %364 = vmatprep.subr.mxu0 0.0
        %365 = vmatpush1.msra.mxu0 0.0
        %366 = vmatprep.subr.mxu0 0.0
        %367 = vmatpush1.msra.mxu0 0.0
        %368 = vmatprep.subr.mxu0 0.0
        %369 = vmatpush1.msra.mxu0 0.0
        %370 = vmatprep.subr.mxu0 0.0
        %371 = vmatpush1.msra.mxu0 0.0
        %372 = vmatprep.subr.mxu0 0.0
        %373 = vmatpush1.msra.mxu0 0.0
        %374 = vmatprep.subr.mxu0 0.0
        %375 = vmatpush1.msra.mxu0 0.0
        %376 = vmatprep.subr.mxu0 0.0
        %377 = vmatpush1.msra.mxu0 0.0
        %378 = vmatprep.subr.mxu0 0.0
        %379 = vmatpush1.msra.mxu0 0.0
        %380 = vmatprep.subr.mxu0 0.0
        %381 = vmatpush1.msra.mxu0 0.0
        %382 = vmatprep.subr.mxu0 0.0
        %383 = vmatpush1.msra.mxu0 0.0
        %384 = vmatprep.subr.mxu0 0.0
        %385 = vmatpush1.msra.mxu0 0.0
        %386 = vmatprep.subr.mxu0 0.0
        %387 = vmatpush1.msra.mxu0 0.0
        %388 = vmatprep.subr.mxu0 0.0
        %389 = vmatpush1.msra.mxu0 0.0
        %390 = vmatprep.subr.mxu0 0.0
        %391 = vmatpush1.msra.mxu0 0.0
        %392 = vmatprep.subr.mxu0 0.0
        %393 = vmatpush1.msra.mxu0 0.0
        %394 = vmatprep.mubr.f32.mxu0 0.0
        %395 = vmatmul.mubr.f32.gmra.mrb[0].mxu0 %v328
        %v396 = vpop.f32.mrb[0].mxu0
        %v397 = vadd.f32 0.0, %v396
        %v398 = vpop.f32.mrb[0].mxu0
        %399 = vdwg.mxu0
        %v400 = vmax.f32 %v397, 0.0
        %v401 = vld [vmem:[#allocation7] sm:$0xf]
        %vm402 = vcmask 31744
        %v404 = vsel %vm402, %v400, 0
        %vm406 = vcmask 1043456
        %v408 = vsel %vm406, %v401, 0
        %410 = vmatprep.subr.mxu0 0.0
        %411 = vmatpush1.msra.mxu0 %v408
        %412 = vmatprep.subr.mxu0 0.0
        %413 = vmatpush1.msra.mxu0 0.0
        %414 = vmatprep.subr.mxu0 0.0
        %415 = vmatpush1.msra.mxu0 0.0
        %416 = vmatprep.subr.mxu0 0.0
        %417 = vmatpush1.msra.mxu0 0.0
        %418 = vmatprep.subr.mxu0 0.0
        %419 = vmatpush1.msra.mxu0 0.0
        %420 = vmatprep.subr.mxu0 0.0
        %421 = vmatpush1.msra.mxu0 0.0
        %422 = vmatprep.subr.mxu0 0.0
        %423 = vmatpush1.msra.mxu0 0.0
        %424 = vmatprep.subr.mxu0 0.0
        %425 = vmatpush1.msra.mxu0 0.0
        %426 = vmatprep.subr.mxu0 0.0
        %427 = vmatpush1.msra.mxu0 0.0
        %428 = vmatprep.subr.mxu0 0.0
        %429 = vmatpush1.msra.mxu0 0.0
        %430 = vmatprep.subr.mxu0 0.0
        %431 = vmatpush1.msra.mxu0 0.0
        %432 = vmatprep.subr.mxu0 0.0
        %433 = vmatpush1.msra.mxu0 0.0
        %434 = vmatprep.subr.mxu0 0.0
        %435 = vmatpush1.msra.mxu0 0.0
        %436 = vmatprep.subr.mxu0 0.0
        %437 = vmatpush1.msra.mxu0 0.0
        %438 = vmatprep.subr.mxu0 0.0
        %439 = vmatpush1.msra.mxu0 0.0
        %440 = vmatprep.subr.mxu0 0.0
        %441 = vmatpush1.msra.mxu0 0.0
        %442 = vmatprep.subr.mxu0 0.0
        %443 = vmatpush1.msra.mxu0 0.0
        %444 = vmatprep.subr.mxu0 0.0
        %445 = vmatpush1.msra.mxu0 0.0
        %446 = vmatprep.subr.mxu0 0.0
        %447 = vmatpush1.msra.mxu0 0.0
        %448 = vmatprep.subr.mxu0 0.0
        %449 = vmatpush1.msra.mxu0 0.0
        %450 = vmatprep.subr.mxu0 0.0
        %451 = vmatpush1.msra.mxu0 0.0
        %452 = vmatprep.subr.mxu0 0.0
        %453 = vmatpush1.msra.mxu0 0.0
        %454 = vmatprep.subr.mxu0 0.0
        %455 = vmatpush1.msra.mxu0 0.0
        %456 = vmatprep.subr.mxu0 0.0
        %457 = vmatpush1.msra.mxu0 0.0
        %458 = vmatprep.subr.mxu0 0.0
        %459 = vmatpush1.msra.mxu0 0.0
        %460 = vmatprep.subr.mxu0 0.0
        %461 = vmatpush1.msra.mxu0 0.0
        %462 = vmatprep.subr.mxu0 0.0
        %463 = vmatpush1.msra.mxu0 0.0
        %464 = vmatprep.subr.mxu0 0.0
        %465 = vmatpush1.msra.mxu0 0.0
        %466 = vmatprep.subr.mxu0 0.0
        %467 = vmatpush1.msra.mxu0 0.0
        %468 = vmatprep.subr.mxu0 0.0
        %469 = vmatpush1.msra.mxu0 0.0
        %470 = vmatprep.subr.mxu0 0.0
        %471 = vmatpush1.msra.mxu0 0.0
        %472 = vmatprep.subr.mxu0 0.0
        %473 = vmatpush1.msra.mxu0 0.0
        %474 = vmatprep.mubr.f32.mxu0 0.0
        %475 = vmatmul.mubr.f32.gmra.mrb[0].mxu0 %v404
        %v476 = vpop.f32.mrb[0].mxu0
        %v477 = vadd.f32 0.0, %v476
        %v478 = vpop.f32.mrb[0].mxu0
        %479 = vdwg.mxu0
        %v480 = vxor.u32 %v477, 2147483648
        %v481 = vmul.f32 %v480, 1.442695
        %v482 = vpow.pop %v481
        %v483 = vadd.f32 %v482, 1.0
        %v484 = vrcp.pop %v483
        %v485 = vmul.f32 1.0, %v484
        %v486 = vlaneseq
        %v487 = vshrl.u32 %v486, 7
        %v488 = vsub.s32 0, %v487
        %v489 = vrot.slane %v485, %v488
        %491 = vbcast.lane.b32.xlu0 %v489, 256
        %v492 = vpop.permute.xlu0 %491
        %s494 = sor.u32 256, 8
        %495 = vbcast.lane.b32.xlu0 %v489, %s494
        %v496 = vpop.permute.xlu0 %495
        %s498 = sor.u32 256, 16
        %499 = vbcast.lane.b32.xlu0 %v489, %s498
        %v500 = vpop.permute.xlu0 %499
        %s502 = sor.u32 256, 24
        %503 = vbcast.lane.b32.xlu0 %v489, %s502
        %v504 = vpop.permute.xlu0 %503
        %s506 = sor.u32 256, 32
        %507 = vbcast.lane.b32.xlu0 %v489, %s506
        %v508 = vpop.permute.xlu0 %507
        %s510 = sor.u32 256, 40
        %511 = vbcast.lane.b32.xlu0 %v489, %s510
        %v512 = vpop.permute.xlu0 %511
        %s514 = sor.u32 256, 48
        %515 = vbcast.lane.b32.xlu0 %v489, %s514
        %v516 = vpop.permute.xlu0 %515
        %s518 = sor.u32 256, 56
        %519 = vbcast.lane.b32.xlu0 %v489, %s518
        %v520 = vpop.permute.xlu0 %519
        %v521 = vmul.f32 %v216, %v492
        %v522 = vmul.f32 %v217, %v496
        %v523 = vmul.f32 %v218, %v500
        %v524 = vmul.f32 %v219, %v504
        %v525 = vmul.f32 %v220, %v508
        %v526 = vmul.f32 %v221, %v512
        %v527 = vmul.f32 %v222, %v516
        %v528 = vmul.f32 %v223, %v520
        %529 = vst.msk [vmem:[%s215] sm:$0xff] %vm224, %v521
        %530 = vst.msk [vmem:[%s215 + $0x8] sm:$0xff] %vm224, %v522
        %531 = vst.msk [vmem:[%s215 + $0x10] sm:$0xff] %vm224, %v523
        %532 = vst.msk [vmem:[%s215 + $0x18] sm:$0xff] %vm224, %v524
        %533 = vst.msk [vmem:[%s215 + $0x20] sm:$0xff] %vm224, %v525
        %534 = vst.msk [vmem:[%s215 + $0x28] sm:$0xff] %vm224, %v526
        %535 = vst.msk [vmem:[%s215 + $0x30] sm:$0xff] %vm224, %v527
        %536 = vst.msk [vmem:[%s215 + $0x38] sm:$0xff] %vm224, %v528
        %s537 = sand.u32 %s97, 1
        %s538 = scalar_lea.sflag [#allocation4], %s537
        %s539 = sand.u32 %s97, 1
        %s540 = smul.addr %s539, 64
        %s541 = scalar_lea.vmem [#allocation8], %s540
        // Predicated region
        $region45: #{tpu_custom_call.1} parent=31 // pred_check
          %p542 = pneg %p107
        $region46: #{tpu_custom_call.1} parent=31 // pred_check_branch
          %544 = sbr.rel (%p542) target = $region48
        $region47: #{tpu_custom_call.1} parent=31 // pred_region
          %s546 = ssub.s32 1024, 1024
          %547 = vsyncadd %s538, %s546
          %s548 = smul.addr %s21, 8
          %s549 = smul.addr %s548, 128
          %s550 = scalar_lea.hbm %s3, %s549
          %s551 = sshll.u32 %s541, 4
          %s552 = int_to_ptr.vmem [resolvable:$true] %s551
          %557 = dma.vmem_to_hbm [thread:$0]  %s552, 1024, %s550, %s538, 128, 128, 8
        $region48: #{tpu_custom_call.1} parent=31 // pred_fallthru
          _
      $region32: #{tpu_custom_call.1} parent=5 // pred_fallthru
        _
      %p558 = scmp.le.s32.totalorder 2, %s16
      // Predicated region
      $region49: #{tpu_custom_call.1} parent=5 // pred_check
        %p559 = pneg %p558
      $region50: #{tpu_custom_call.1} parent=5 // pred_check_branch
        %561 = sbr.rel (%p559) target = $region52
      $region51: #{tpu_custom_call.1} parent=5 // pred_region
        %s562 = ssub.s32 %s16, 2
        // Predicated region
        $region53: #{tpu_custom_call.1} parent=51 // pred_check
          %p563 = pneg %p113
        $region54: #{tpu_custom_call.1} parent=51 // pred_check_branch
          %565 = sbr.rel (%p563) target = $region56
        $region55: #{tpu_custom_call.1} parent=51 // pred_region
          %s566 = sand.u32 %s98, 1
          %s567 = scalar_lea.sflag [#allocation4], %s566
          %s568 = sand.u32 %s98, 1
          %s569 = smul.addr %s568, 64
          %s570 = scalar_lea.vmem [#allocation8], %s569
          %571 = dma.done %s567, 1024
        $region56: #{tpu_custom_call.1} parent=51 // pred_fallthru
          _
      $region52: #{tpu_custom_call.1} parent=5 // pred_fallthru
        _
    $region6: #{tpu_custom_call.1} parent=1 // loop_footer
      %s20 = sadd.s32 1, %s16
    $region7: #{tpu_custom_call.1} parent=1 // loop_footer_branch
      %15 = sbr.rel target = $region3
    $region8: #{tpu_custom_call.1} parent=1 // loop_exit
      _
    %572 = vsyncpa [#allocation3], 1
    %s573 = scalar_lea.sflag [#allocation3], 1
    %574 = vsyncpa %s573, 1
    %575 = vsyncpa [#allocation6], 1
    %576 = vsyncpa [#allocation4], 1
    %s577 = scalar_lea.sflag [#allocation4], 1
    %578 = vsyncpa %s577, 1

</llo_original>
